<compile_context>
chip_gen: v7x
topology: tpu7x:2x2x1
jax: 0.10.0
libtpu: 0.0.40
codegen_flags: <defaults>
</compile_context>

<pallas_src>
import functools

import jax
import jax.numpy as jnp
from jax.experimental import pallas as pl
from jax.experimental.pallas import tpu as pltpu


_VMEM_LIMIT = 48 * 1024 * 1024  # explicit scoped-VMEM allowance (> 16/32 MiB defaults)


def _round_up(x, m):
    return ((x + m - 1) // m) * m


# ---------------------------------------------------------------------------
# Linear kernel:  y = x @ W + b     (x: (M, K), W: (K, N) stored (in, out))
# ---------------------------------------------------------------------------
def _linear_kernel(x_ref, w_ref, b_ref, o_ref):
    acc = jnp.dot(x_ref[...], w_ref[...], preferred_element_type=jnp.float32)
    o_ref[...] = (acc + b_ref[...].astype(jnp.float32)).astype(o_ref.dtype)


def linear_pallas(x2d, w, b, *, tm=256):
    M, K = x2d.shape
    N = w.shape[1]
    tm = min(tm, _round_up(M, 8))          # big tile, multiple of 8 sublanes
    Mp = _round_up(M, tm)                  # pad token axis -> any M works
    if Mp != M:
        x2d = jnp.pad(x2d, ((0, Mp - M), (0, 0)))
    b2d = b.reshape(1, N)
    out = pl.pallas_call(
        _linear_kernel,
        out_shape=jax.ShapeDtypeStruct((Mp, N), x2d.dtype),
        grid_spec=pltpu.PrefetchScalarGridSpec(
            num_scalar_prefetch=0,
            grid=(Mp // tm,),
            in_specs=[
                pl.BlockSpec((tm, K), lambda i: (i, 0)),   # x tile
                pl.BlockSpec((K, N), lambda i: (0, 0)),    # W (resident)
                pl.BlockSpec((1, N), lambda i: (0, 0)),    # b (resident)
            ],
            out_specs=pl.BlockSpec((tm, N), lambda i: (i, 0)),
        ),
        compiler_params=pltpu.CompilerParams(
            dimension_semantics=("parallel",),
            vmem_limit_bytes=_VMEM_LIMIT),
    )(x2d, w, b2d)
    return out[:M]


# ---------------------------------------------------------------------------
# Fused attention kernel:  out = softmax(scale * q @ k^T) @ v
#   q: (B, Nq, D), k/v: (B, Nk, D)  ->  (B, Nq, D)
#   Processes `bb` batch groups per grid step (amortizes per-step overhead).
# ---------------------------------------------------------------------------
def _attn_kernel(q_ref, k_ref, v_ref, o_ref, *, scale):
    q = q_ref[...].astype(jnp.float32) * scale
    k = k_ref[...].astype(jnp.float32)
    v = v_ref[...]
    s = jnp.einsum("bqd,bkd->bqk", q, k, preferred_element_type=jnp.float32)
    m = jnp.max(s, axis=-1, keepdims=True)          # stable softmax, all f32
    p = jnp.exp(s - m)
    l = jnp.sum(p, axis=-1, keepdims=True)
    p = p / l
    o = jnp.einsum("bqk,bkd->bqd", p.astype(v.dtype), v,
                   preferred_element_type=jnp.float32)
    o_ref[...] = o.astype(o_ref.dtype)


def attention_pallas(q, k, v, *, scale, bb=8):
    Bq, Nq, D = q.shape
    Nk = k.shape[1]
    bb = min(bb, Bq)
    Bp = _round_up(Bq, bb)                 # pad batch axis so any B works
    if Bp != Bq:
        pad = ((0, Bp - Bq), (0, 0), (0, 0))
        q = jnp.pad(q, pad)
        k = jnp.pad(k, pad)
        v = jnp.pad(v, pad)
    kernel = functools.partial(_attn_kernel, scale=scale)
    out = pl.pallas_call(
        kernel,
        out_shape=jax.ShapeDtypeStruct((Bp, Nq, D), q.dtype),
        grid_spec=pltpu.PrefetchScalarGridSpec(
            num_scalar_prefetch=0,
            grid=(Bp // bb,),
            in_specs=[
                pl.BlockSpec((bb, Nq, D), lambda i: (i, 0, 0)),
                pl.BlockSpec((bb, Nk, D), lambda i: (i, 0, 0)),
                pl.BlockSpec((bb, Nk, D), lambda i: (i, 0, 0)),
            ],
            out_specs=pl.BlockSpec((bb, Nq, D), lambda i: (i, 0, 0)),
        ),
        compiler_params=pltpu.CompilerParams(
            dimension_semantics=("parallel",),
            vmem_limit_bytes=_VMEM_LIMIT),
    )(q, k, v)
    return out[:Bq]


# ---------------------------------------------------------------------------
# einops-style rearranges (layout plumbing, done in the wrapper)
# ---------------------------------------------------------------------------
def _rearrange_fwd(t, mode, frames, n_sp):
    BH, _, d = t.shape
    t = t.reshape(BH, frames, n_sp, d)
    if mode == "space":            # 'b (f n) d -> (b f) n d'
        return t.reshape(BH * frames, n_sp, d)
    elif mode == "time":           # 'b (f n) d -> (b n) f d'
        return jnp.transpose(t, (0, 2, 1, 3)).reshape(BH * n_sp, frames, d)
    raise ValueError(f"unknown mode {mode!r}")


def _rearrange_bwd(t, mode, frames, n_sp, BH):
    d = t.shape[-1]
    if mode == "space":            # '(b f) n d -> b (f n) d'
        t = t.reshape(BH, frames, n_sp, d)
    elif mode == "time":           # '(b n) f d -> b (f n) d'
        t = jnp.transpose(t.reshape(BH, n_sp, frames, d), (0, 2, 1, 3))
    else:
        raise ValueError(f"unknown mode {mode!r}")
    return t.reshape(BH, frames * n_sp, d)


# ---------------------------------------------------------------------------
# Full Attention forward (Pallas hot path)
# ---------------------------------------------------------------------------
def attention_forward_pallas(x, w_qkv, w_out, b_out, *, heads, dim_head,
                             frames, mode="space"):
    # TODO(synk): generic einops_from/einops_to pattern strings are not parsed;
    # the two patterns cd_vit uses ('b (f n) d -> (b f) n d' spatial and
    # 'b (f n) d -> (b n) f d' temporal) are implemented as mode="space"/"time".
    B, N, dim = x.shape
    inner = heads * dim_head
    scale = float(dim_head) ** -0.5
    assert (N - 1) % frames == 0
    n_sp = (N - 1) // frames
    BH = B * heads

    # 1) QKV projection (nn.Linear without bias)
    qkv = linear_pallas(x.reshape(B * N, dim), w_qkv,
                        jnp.zeros((3 * inner,), dtype=x.dtype))
    qkv = qkv.reshape(B, N, 3 * inner)
    q, k, v = jnp.split(qkv, 3, axis=-1)

    def to_heads(t):               # 'b n (h d) -> (b h) n d'
        return (t.reshape(B, N, heads, dim_head)
                 .transpose(0, 2, 1, 3)
                 .reshape(BH, N, dim_head))

    q, k, v = to_heads(q), to_heads(k), to_heads(v)

    cls_q, q_ = q[:, :1], q[:, 1:]
    cls_k, k_ = k[:, :1], k[:, 1:]
    cls_v, v_ = v[:, :1], v[:, 1:]

    # 2) cls token attends over ALL tokens (q scaling happens inside kernel)
    cls_out = attention_pallas(cls_q, k, v, scale=scale)

    # 3) grouped (space/time) attention over remaining tokens, cls k/v prepended
    q_r = _rearrange_fwd(q_, mode, frames, n_sp)
    k_r = _rearrange_fwd(k_, mode, frames, n_sp)
    v_r = _rearrange_fwd(v_, mode, frames, n_sp)
    r = q_r.shape[0] // BH

    def rep_cls(t):                # 'b () d -> (b r) () d'
        return (jnp.broadcast_to(t[:, None], (BH, r, 1, dim_head))
                  .reshape(BH * r, 1, dim_head))

    k_full = jnp.concatenate([rep_cls(cls_k), k_r], axis=1)
    v_full = jnp.concatenate([rep_cls(cls_v), v_r], axis=1)

    out = attention_pallas(q_r, k_full, v_full, scale=scale)
    out = _rearrange_bwd(out, mode, frames, n_sp, BH)
    out = jnp.concatenate([cls_out, out], axis=1)        # (BH, N, d)

    # 4) merge heads: '(b h) n d -> b n (h d)'
    out = (out.reshape(B, heads, N, dim_head)
              .transpose(0, 2, 1, 3)
              .reshape(B * N, inner))

    # 5) output projection; Dropout(p=0.0) is the identity.
    out = linear_pallas(out, w_out, b_out)
    return out.reshape(B, N, dim)


# ---------------------------------------------------------------------------
# Pure-JAX reference mirroring the PyTorch module
# ---------------------------------------------------------------------------
def _attn_ref(q, k, v):
    hp = jax.lax.Precision.HIGHEST
    sim = jnp.einsum("bid,bjd->bij", q, k, precision=hp)
    p = jax.nn.softmax(sim, axis=-1)
    return jnp.einsum("bij,bjd->bid", p, v, precision=hp)


def attention_forward_ref(x, w_qkv, w_out, b_out, *, heads, dim_head,
                          frames, mode="space"):
    B, N, dim = x.shape
    inner = heads * dim_head
    scale = float(dim_head) ** -0.5
    n_sp = (N - 1) // frames
    BH = B * heads
    hp = jax.lax.Precision.HIGHEST

    qkv = jnp.einsum("bnd,de->bne", x, w_qkv, precision=hp)
    q, k, v = jnp.split(qkv, 3, axis=-1)
    to_heads = lambda t: (t.reshape(B, N, heads, dim_head)
                           .transpose(0, 2, 1, 3).reshape(BH, N, dim_head))
    q, k, v = to_heads(q), to_heads(k), to_heads(v)
    q = q * scale
    cls_q, q_ = q[:, :1], q[:, 1:]
    cls_k, k_ = k[:, :1], k[:, 1:]
    cls_v, v_ = v[:, :1], v[:, 1:]
    cls_out = _attn_ref(cls_q, k, v)
    q_r = _rearrange_fwd(q_, mode, frames, n_sp)
    k_r = _rearrange_fwd(k_, mode, frames, n_sp)
    v_r = _rearrange_fwd(v_, mode, frames, n_sp)
    r = q_r.shape[0] // BH
    rep = lambda t: (jnp.broadcast_to(t[:, None], (BH, r, 1, dim_head))
                       .reshape(BH * r, 1, dim_head))
    k_full = jnp.concatenate([rep(cls_k), k_r], axis=1)
    v_full = jnp.concatenate([rep(cls_v), v_r], axis=1)
    out = _attn_ref(q_r, k_full, v_full)
    out = _rearrange_bwd(out, mode, frames, n_sp, BH)
    out = jnp.concatenate([cls_out, out], axis=1)
    out = (out.reshape(B, heads, N, dim_head)
              .transpose(0, 2, 1, 3).reshape(B, N, inner))
    return jnp.einsum("bni,id->bnd", out, w_out, precision=hp) + b_out


if __name__ == "__main__":
    # Small shapes consistent with Attention(dim, dim_head=64, heads):
    # dim=128, heads=2, dim_head=64 -> inner_dim=128 (lane-dense feature axes),
    # 2 frames x 8 patches + 1 cls token = 17 tokens.
    B, dim = 2, 128
    heads, dim_head = 2, 64
    frames, n_sp = 2, 8
    N = 1 + frames * n_sp
    inner = heads * dim_head

    key = jax.random.PRNGKey(0)
    k_x, k_qkv, k_wo, k_bo = jax.random.split(key, 4)

    x = jax.random.normal(k_x, (B, N, dim), dtype=jnp.float32)

    # PyTorch-Linear-style uniform init; weights stored (in, out) so the
    # kernel does plain row-major x @ W (== torch's x @ W.T).
    lim_in = 1.0 / (dim ** 0.5)
    lim_inner = 1.0 / (inner ** 0.5)
    w_qkv = jax.random.uniform(k_qkv, (dim, 3 * inner), minval=-lim_in,
                               maxval=lim_in, dtype=jnp.float32)
    w_out = jax.random.uniform(k_wo, (inner, dim), minval=-lim_inner,
                               maxval=lim_inner, dtype=jnp.float32)
    b_out = jax.random.uniform(k_bo, (dim,), minval=-lim_inner,
                               maxval=lim_inner, dtype=jnp.float32)

    for mode in ("space", "time"):
        out = attention_forward_pallas(x, w_qkv, w_out, b_out,
                                       heads=heads, dim_head=dim_head,
                                       frames=frames, mode=mode)
        out = jax.block_until_ready(out)
        ref = attention_forward_ref(x, w_qkv, w_out, b_out,
                                    heads=heads, dim_head=dim_head,
                                    frames=frames, mode=mode)
        assert out.shape == (B, N, dim)
        assert jnp.allclose(out, ref, atol=2e-5, rtol=2e-5), (
            f"mismatch vs reference (mode={mode}), "
            f"max abs err {float(jnp.max(jnp.abs(out - ref)))}")

    print("KERNEL_OK")
</pallas_src>

<mosaic_0001>
module attributes {stable_mosaic.version = 11 : i64} {
  func.func @_linear_kernel(%arg0: i32, %arg1: memref<40x128xf32, #tpu.memory_space<vmem>>, %arg2: memref<128x384xf32, #tpu.memory_space<vmem>>, %arg3: memref<1x384xf32, #tpu.memory_space<vmem>>, %arg4: memref<40x384xf32, #tpu.memory_space<vmem>>) attributes {dimension_semantics = [#tpu.dimension_semantics<parallel>], iteration_bounds = array<i64: 1>, scalar_prefetch = 0 : i64, scratch_operands = 0 : i64, tpu.core_type = #tpu.core_type<tc>, window_params = [{transform_indices = @transform_0, window_bounds = array<i64: 40, 128>}, {pipeline_mode = #tpu.pipeline_mode<synchronous>, transform_indices = @transform_1, window_bounds = array<i64: 128, 384>}, {pipeline_mode = #tpu.pipeline_mode<synchronous>, transform_indices = @transform_2, window_bounds = array<i64: 1, 384>}, {transform_indices = @transform_3, window_bounds = array<i64: 40, 384>}]} {
    %c0 = arith.constant 0 : index
    %c0_0 = arith.constant 0 : index
    %0 = vector.load %arg1[%c0, %c0_0] : memref<40x128xf32, #tpu.memory_space<vmem>>, vector<40x128xf32>
    %c0_1 = arith.constant 0 : index
    %c0_2 = arith.constant 0 : index
    %1 = vector.load %arg2[%c0_1, %c0_2] : memref<128x384xf32, #tpu.memory_space<vmem>>, vector<128x384xf32>
    %cst = arith.constant dense<0.000000e+00> : vector<40x384xf32>
    %2 = tpu.matmul %0, %1, %cst {dimension_numbers = #tpu.dot_dimension_numbers<[1], [0], [0], [1], [0, 0, 1, 1], [], []>} : vector<40x128xf32>, vector<128x384xf32>, vector<40x384xf32> -> vector<40x384xf32>
    %c0_3 = arith.constant 0 : index
    %c0_4 = arith.constant 0 : index
    %3 = vector.load %arg3[%c0_3, %c0_4] : memref<1x384xf32, #tpu.memory_space<vmem>>, vector<1x384xf32>
    %4 = vector.broadcast %3 : vector<1x384xf32> to vector<40x384xf32>
    %5 = arith.addf %2, %4 : vector<40x384xf32>
    %c0_5 = arith.constant 0 : index
    %c0_6 = arith.constant 0 : index
    %6 = vector.load %arg4[%c0_5, %c0_6] : memref<40x384xf32, #tpu.memory_space<vmem>>, vector<40x384xf32>
    tpu.vector_store %arg4[%c0_5, %c0_6], %5 {strides = array<i32>} : memref<40x384xf32, #tpu.memory_space<vmem>>, vector<40x384xf32>,
    return
  }
  func.func @transform_0(%arg0: i32) -> (i32, i32) {
    %c0_i32 = arith.constant 0 : i32
    %c0_i32_0 = arith.constant 0 : i32
    return %arg0, %c0_i32 : i32, i32
  }
  func.func @transform_1(%arg0: i32) -> (i32, i32) {
    %c0_i32 = arith.constant 0 : i32
    %c0_i32_0 = arith.constant 0 : i32
    %c0_i32_1 = arith.constant 0 : i32
    return %c0_i32, %c0_i32_0 : i32, i32
  }
  func.func @transform_2(%arg0: i32) -> (i32, i32) {
    %c0_i32 = arith.constant 0 : i32
    %c0_i32_0 = arith.constant 0 : i32
    %c0_i32_1 = arith.constant 0 : i32
    return %c0_i32, %c0_i32_0 : i32, i32
  }
  func.func @transform_3(%arg0: i32) -> (i32, i32) {
    %c0_i32 = arith.constant 0 : i32
    %c0_i32_0 = arith.constant 0 : i32
    return %arg0, %c0_i32 : i32, i32
  }
}

</mosaic_0001>

<llo_original>
// kernel: tpu_custom_call.1
$region0: #{tpu_custom_call.1}
  #allocation0 [shape = 'u32[]', space=smem, size = 0x4, offset = 0x4, fixed_abs, tag = 'smem constant byte address 0x4 - core index']
  #allocation1 [shape = 'u32[144,128]{1,0:T(1,128)}', space=vmem, size = 0x12000, scoped, tag = 'internal scratch']
  %s0 = inlined_call_operand.hbm [shape: f32[40,128], index: 0, kind: input, shape index: {}]
  %s1 = inlined_call_operand.hbm [shape: f32[128,384], index: 1, kind: input, shape index: {}]
  %s2 = inlined_call_operand.vmem [shape: f32[1,384], index: 2, kind: input, shape index: {}]
  %s3 = inlined_call_operand.hbm [shape: f32[40,384], index: 3, kind: output, shape index: {}]
  %s4 = sld [smem:[#allocation0]]
  $region30: #{tpu_custom_call.1} parent=0
    _
  %s6 = ssub.s32 1, %s4
  %s7 = scalar_select 0, %s6, %s4
  $region1: #{tpu_custom_call.1} parent=0
    #allocation2 [shape = 'u8[20480]{0}', space=vmem, size = 0x5000, scoped, tag = 'input window, operand 0, single buffered']
    #allocation3 [shape = 's32[1]{0}', space=sflag, size = 0x4, scoped, tag = 'scoped memory for tpu_custom_call.1']
    #allocation4 [shape = 's32[1]{0}', space=sflag, size = 0x4, scoped, tag = 'scoped memory for tpu_custom_call.1']
    #allocation5 [shape = 'u8[196608]{0}', space=vmem, size = 0x30000, scoped, tag = 'input window, operand 1, single buffered']
    #allocation6 [shape = 's32[1]{0}', space=sflag, size = 0x4, scoped, tag = 'scoped memory for tpu_custom_call.1']
    #allocation7 [shape = 'u8[61440]{0}', space=vmem, size = 0xf000, scoped, tag = 'output window, operand 0, single buffered']
    %8 = vsyncpa [#allocation3], 0
    %9 = vsyncpa [#allocation6], 0
    %10 = vsyncpa [#allocation4], 0
    // Predicated region
    $region2: #{tpu_custom_call.1} parent=1 // pred_check
      _
    $region3: #{tpu_custom_call.1} parent=1 // pred_check_branch
      %12 = sbr.rel (0) target = $region5
    $region4: #{tpu_custom_call.1} parent=1 // pred_region
      %s14 = ssub.s32 640, 640
      %15 = vsyncadd [#allocation3], %s14
      %s16 = sshll.u32 [#allocation2], 4
      %s17 = int_to_ptr.vmem [resolvable:$true] %s16
      %22 = dma.hbm_to_vmem [thread:$0]  %s0, 640, %s17, [#allocation3], 128, 128, 8
    $region5: #{tpu_custom_call.1} parent=1 // pred_fallthru
      _
    // Predicated region
    $region6: #{tpu_custom_call.1} parent=1 // pred_check
      _
    $region7: #{tpu_custom_call.1} parent=1 // pred_check_branch
      %24 = sbr.rel (0) target = $region9
    $region8: #{tpu_custom_call.1} parent=1 // pred_region
      %s26 = ssub.s32 6144, 6144
      %27 = vsyncadd [#allocation6], %s26
      %s28 = sshll.u32 [#allocation5], 4
      %s29 = int_to_ptr.vmem [resolvable:$true] %s28
      %34 = dma.hbm_to_vmem [thread:$0]  %s1, 6144, %s29, [#allocation6], 384, 384, 24
    $region9: #{tpu_custom_call.1} parent=1 // pred_fallthru
      _
    // Predicated region
    $region10: #{tpu_custom_call.1} parent=1 // pred_check
      _
    $region11: #{tpu_custom_call.1} parent=1 // pred_check_branch
      %36 = sbr.rel (0) target = $region13
    $region12: #{tpu_custom_call.1} parent=1 // pred_region
      _
    $region13: #{tpu_custom_call.1} parent=1 // pred_fallthru
      _
    // Predicated region
    $region14: #{tpu_custom_call.1} parent=1 // pred_check
      _
    $region15: #{tpu_custom_call.1} parent=1 // pred_check_branch
      %38 = sbr.rel (0) target = $region17
    $region16: #{tpu_custom_call.1} parent=1 // pred_region
      %39 = dma.done [#allocation3], 640
    $region17: #{tpu_custom_call.1} parent=1 // pred_fallthru
      _
    // Predicated region
    $region18: #{tpu_custom_call.1} parent=1 // pred_check
      _
    $region19: #{tpu_custom_call.1} parent=1 // pred_check_branch
      %41 = sbr.rel (0) target = $region21
    $region20: #{tpu_custom_call.1} parent=1 // pred_region
      %42 = dma.done [#allocation6], 6144
    $region21: #{tpu_custom_call.1} parent=1 // pred_fallthru
      _
    %v43 = vld [vmem:[#allocation2] sm:$0xff]
    %v44 = vld [vmem:[#allocation2 + $0x8] sm:$0xff]
    %v45 = vld [vmem:[#allocation2 + $0x10] sm:$0xff]
    %v46 = vld [vmem:[#allocation2 + $0x18] sm:$0xff]
    %v47 = vld [vmem:[#allocation2 + $0x20] sm:$0xff]
    %v48 = vld [vmem:[#allocation5] sm:$0xff]
    %v49 = vld [vmem:[#allocation5 + $0x8] sm:$0xff]
    %v50 = vld [vmem:[#allocation5 + $0x10] sm:$0xff]
    %v51 = vld [vmem:[#allocation5 + $0x18] sm:$0xff]
    %v52 = vld [vmem:[#allocation5 + $0x20] sm:$0xff]
    %v53 = vld [vmem:[#allocation5 + $0x28] sm:$0xff]
    %v54 = vld [vmem:[#allocation5 + $0x30] sm:$0xff]
    %v55 = vld [vmem:[#allocation5 + $0x38] sm:$0xff]
    %v56 = vld [vmem:[#allocation5 + $0x40] sm:$0xff]
    %v57 = vld [vmem:[#allocation5 + $0x48] sm:$0xff]
    %v58 = vld [vmem:[#allocation5 + $0x50] sm:$0xff]
    %v59 = vld [vmem:[#allocation5 + $0x58] sm:$0xff]
    %v60 = vld [vmem:[#allocation5 + $0x60] sm:$0xff]
    %v61 = vld [vmem:[#allocation5 + $0x68] sm:$0xff]
    %v62 = vld [vmem:[#allocation5 + $0x70] sm:$0xff]
    %v63 = vld [vmem:[#allocation5 + $0x78] sm:$0xff]
    %v64 = vld [vmem:[#allocation5 + $0x80] sm:$0xff]
    %v65 = vld [vmem:[#allocation5 + $0x88] sm:$0xff]
    %v66 = vld [vmem:[#allocation5 + $0x90] sm:$0xff]
    %v67 = vld [vmem:[#allocation5 + $0x98] sm:$0xff]
    %v68 = vld [vmem:[#allocation5 + $0xa0] sm:$0xff]
    %v69 = vld [vmem:[#allocation5 + $0xa8] sm:$0xff]
    %v70 = vld [vmem:[#allocation5 + $0xb0] sm:$0xff]
    %v71 = vld [vmem:[#allocation5 + $0xb8] sm:$0xff]
    %v72 = vld [vmem:[#allocation5 + $0xc0] sm:$0xff]
    %v73 = vld [vmem:[#allocation5 + $0xc8] sm:$0xff]
    %v74 = vld [vmem:[#allocation5 + $0xd0] sm:$0xff]
    %v75 = vld [vmem:[#allocation5 + $0xd8] sm:$0xff]
    %v76 = vld [vmem:[#allocation5 + $0xe0] sm:$0xff]
    %v77 = vld [vmem:[#allocation5 + $0xe8] sm:$0xff]
    %v78 = vld [vmem:[#allocation5 + $0xf0] sm:$0xff]
    %v79 = vld [vmem:[#allocation5 + $0xf8] sm:$0xff]
    %v80 = vld [vmem:[#allocation5 + $0x100] sm:$0xff]
    %v81 = vld [vmem:[#allocation5 + $0x108] sm:$0xff]
    %v82 = vld [vmem:[#allocation5 + $0x110] sm:$0xff]
    %v83 = vld [vmem:[#allocation5 + $0x118] sm:$0xff]
    %v84 = vld [vmem:[#allocation5 + $0x120] sm:$0xff]
    %v85 = vld [vmem:[#allocation5 + $0x128] sm:$0xff]
    %v86 = vld [vmem:[#allocation5 + $0x130] sm:$0xff]
    %v87 = vld [vmem:[#allocation5 + $0x138] sm:$0xff]
    %v88 = vld [vmem:[#allocation5 + $0x140] sm:$0xff]
    %v89 = vld [vmem:[#allocation5 + $0x148] sm:$0xff]
    %v90 = vld [vmem:[#allocation5 + $0x150] sm:$0xff]
    %v91 = vld [vmem:[#allocation5 + $0x158] sm:$0xff]
    %v92 = vld [vmem:[#allocation5 + $0x160] sm:$0xff]
    %v93 = vld [vmem:[#allocation5 + $0x168] sm:$0xff]
    %v94 = vld [vmem:[#allocation5 + $0x170] sm:$0xff]
    %v95 = vld [vmem:[#allocation5 + $0x178] sm:$0xff]
    %v96 = vld [vmem:[%s2] sm:$0x7]
    %v98 = vlaneseq
    %v99 = vshrl.u32 %v98, 7
    %v100 = vsub.s32 0, %v99
    %v101 = vrot.slane %v96, %v100
    %v102 = vlaneseq
    %v103 = vshrl.u32 %v102, 7
    %v104 = vsub.s32 1, %v103
    %v105 = vrot.slane %v96, %v104
    %v106 = vlaneseq
    %v107 = vshrl.u32 %v106, 7
    %v108 = vsub.s32 2, %v107
    %v109 = vrot.slane %v96, %v108
    %113 = vmatprep.subr.mxu0 %v49
    %114 = vmatpush1.msra.mxu0 %v48
    %115 = vmatprep.subr.mxu0 %v52
    %116 = vmatpush1.msra.mxu0 %v51
    %117 = vmatprep.subr.mxu0 %v55
    %118 = vmatpush1.msra.mxu0 %v54
    %119 = vmatprep.subr.mxu0 %v58
    %120 = vmatpush1.msra.mxu0 %v57
    %121 = vmatprep.subr.mxu0 %v61
    %122 = vmatpush1.msra.mxu0 %v60
    %123 = vmatprep.subr.mxu0 %v64
    %124 = vmatpush1.msra.mxu0 %v63
    %125 = vmatprep.subr.mxu0 %v67
    %126 = vmatpush1.msra.mxu0 %v66
    %127 = vmatprep.subr.mxu0 %v70
    %128 = vmatpush1.msra.mxu0 %v69
    %129 = vmatprep.subr.mxu0 %v73
    %130 = vmatpush1.msra.mxu0 %v72
    %131 = vmatprep.subr.mxu0 %v76
    %132 = vmatpush1.msra.mxu0 %v75
    %133 = vmatprep.subr.mxu0 %v79
    %134 = vmatpush1.msra.mxu0 %v78
    %135 = vmatprep.subr.mxu0 %v82
    %136 = vmatpush1.msra.mxu0 %v81
    %137 = vmatprep.subr.mxu0 %v85
    %138 = vmatpush1.msra.mxu0 %v84
    %139 = vmatprep.subr.mxu0 %v88
    %140 = vmatpush1.msra.mxu0 %v87
    %141 = vmatprep.subr.mxu0 %v91
    %142 = vmatpush1.msra.mxu0 %v90
    %143 = vmatprep.subr.mxu0 %v94
    %144 = vmatpush1.msra.mxu0 %v93
    %145 = vmatprep.subr.mxu0 0.0
    %146 = vmatpush1.msra.mxu0 0.0
    %147 = vmatprep.subr.mxu0 0.0
    %148 = vmatpush1.msra.mxu0 0.0
    %149 = vmatprep.subr.mxu0 0.0
    %150 = vmatpush1.msra.mxu0 0.0
    %151 = vmatprep.subr.mxu0 0.0
    %152 = vmatpush1.msra.mxu0 0.0
    %153 = vmatprep.subr.mxu0 0.0
    %154 = vmatpush1.msra.mxu0 0.0
    %155 = vmatprep.subr.mxu0 0.0
    %156 = vmatpush1.msra.mxu0 0.0
    %157 = vmatprep.subr.mxu0 0.0
    %158 = vmatpush1.msra.mxu0 0.0
    %159 = vmatprep.subr.mxu0 0.0
    %160 = vmatpush1.msra.mxu0 0.0
    %161 = vmatprep.subr.mxu0 0.0
    %162 = vmatpush1.msra.mxu0 0.0
    %163 = vmatprep.subr.mxu0 0.0
    %164 = vmatpush1.msra.mxu0 0.0
    %165 = vmatprep.subr.mxu0 0.0
    %166 = vmatpush1.msra.mxu0 0.0
    %167 = vmatprep.subr.mxu0 0.0
    %168 = vmatpush1.msra.mxu0 0.0
    %169 = vmatprep.subr.mxu0 0.0
    %170 = vmatpush1.msra.mxu0 0.0
    %171 = vmatprep.subr.mxu0 0.0
    %172 = vmatpush1.msra.mxu0 0.0
    %173 = vmatprep.subr.mxu0 0.0
    %174 = vmatpush1.msra.mxu0 0.0
    %175 = vmatprep.subr.mxu0 0.0
    %176 = vmatpush1.msra.mxu0 0.0
    %177 = vmatprep.mubr.f32.mxu0 0.0
    %178 = vmatmul.mubr.f32.gmra.mrb[0].mxu0 %v43
    %v179 = vpop.f32.mrb[0].mxu0
    %v180 = vadd.f32 %v101, %v179
    %v181 = vpop.f32.mrb[0].mxu0
    %v182 = vadd.f32 %v105, %v181
    %183 = vmatprep.mubr.f32.mxu0 0.0
    %184 = vmatmul.mubr.f32.gmra.mrb[0].mxu0 %v44
    %v185 = vpop.f32.mrb[0].mxu0
    %v186 = vadd.f32 %v101, %v185
    %v187 = vpop.f32.mrb[0].mxu0
    %v188 = vadd.f32 %v105, %v187
    %189 = vmatprep.mubr.f32.mxu0 0.0
    %190 = vmatmul.mubr.f32.gmra.mrb[0].mxu0 %v45
    %v191 = vpop.f32.mrb[0].mxu0
    %v192 = vadd.f32 %v101, %v191
    %v193 = vpop.f32.mrb[0].mxu0
    %v194 = vadd.f32 %v105, %v193
    %195 = vmatprep.mubr.f32.mxu0 0.0
    %196 = vmatmul.mubr.f32.gmra.mrb[0].mxu0 %v46
    %v197 = vpop.f32.mrb[0].mxu0
    %v198 = vadd.f32 %v101, %v197
    %v199 = vpop.f32.mrb[0].mxu0
    %v200 = vadd.f32 %v105, %v199
    %201 = vmatprep.mubr.f32.mxu0 0.0
    %202 = vmatmul.mubr.f32.gmra.mrb[0].mxu0 %v47
    %v203 = vpop.f32.mrb[0].mxu0
    %v204 = vadd.f32 %v101, %v203
    %v205 = vpop.f32.mrb[0].mxu0
    %v206 = vadd.f32 %v105, %v205
    %207 = vdwg.mxu0
    %208 = vmatprep.subr.mxu0 0.0
    %209 = vmatpush1.msra.mxu0 %v50
    %210 = vmatprep.subr.mxu0 0.0
    %211 = vmatpush1.msra.mxu0 %v53
    %212 = vmatprep.subr.mxu0 0.0
    %213 = vmatpush1.msra.mxu0 %v56
    %214 = vmatprep.subr.mxu0 0.0
    %215 = vmatpush1.msra.mxu0 %v59
    %216 = vmatprep.subr.mxu0 0.0
    %217 = vmatpush1.msra.mxu0 %v62
    %218 = vmatprep.subr.mxu0 0.0
    %219 = vmatpush1.msra.mxu0 %v65
    %220 = vmatprep.subr.mxu0 0.0
    %221 = vmatpush1.msra.mxu0 %v68
    %222 = vmatprep.subr.mxu0 0.0
    %223 = vmatpush1.msra.mxu0 %v71
    %224 = vmatprep.subr.mxu0 0.0
    %225 = vmatpush1.msra.mxu0 %v74
    %226 = vmatprep.subr.mxu0 0.0
    %227 = vmatpush1.msra.mxu0 %v77
    %228 = vmatprep.subr.mxu0 0.0
    %229 = vmatpush1.msra.mxu0 %v80
    %230 = vmatprep.subr.mxu0 0.0
    %231 = vmatpush1.msra.mxu0 %v83
    %232 = vmatprep.subr.mxu0 0.0
    %233 = vmatpush1.msra.mxu0 %v86
    %234 = vmatprep.subr.mxu0 0.0
    %235 = vmatpush1.msra.mxu0 %v89
    %236 = vmatprep.subr.mxu0 0.0
    %237 = vmatpush1.msra.mxu0 %v92
    %238 = vmatprep.subr.mxu0 0.0
    %239 = vmatpush1.msra.mxu0 %v95
    %240 = vmatprep.subr.mxu0 0.0
    %241 = vmatpush1.msra.mxu0 0.0
    %242 = vmatprep.subr.mxu0 0.0
    %243 = vmatpush1.msra.mxu0 0.0
    %244 = vmatprep.subr.mxu0 0.0
    %245 = vmatpush1.msra.mxu0 0.0
    %246 = vmatprep.subr.mxu0 0.0
    %247 = vmatpush1.msra.mxu0 0.0
    %248 = vmatprep.subr.mxu0 0.0
    %249 = vmatpush1.msra.mxu0 0.0
    %250 = vmatprep.subr.mxu0 0.0
    %251 = vmatpush1.msra.mxu0 0.0
    %252 = vmatprep.subr.mxu0 0.0
    %253 = vmatpush1.msra.mxu0 0.0
    %254 = vmatprep.subr.mxu0 0.0
    %255 = vmatpush1.msra.mxu0 0.0
    %256 = vmatprep.subr.mxu0 0.0
    %257 = vmatpush1.msra.mxu0 0.0
    %258 = vmatprep.subr.mxu0 0.0
    %259 = vmatpush1.msra.mxu0 0.0
    %260 = vmatprep.subr.mxu0 0.0
    %261 = vmatpush1.msra.mxu0 0.0
    %262 = vmatprep.subr.mxu0 0.0
    %263 = vmatpush1.msra.mxu0 0.0
    %264 = vmatprep.subr.mxu0 0.0
    %265 = vmatpush1.msra.mxu0 0.0
    %266 = vmatprep.subr.mxu0 0.0
    %267 = vmatpush1.msra.mxu0 0.0
    %268 = vmatprep.subr.mxu0 0.0
    %269 = vmatpush1.msra.mxu0 0.0
    %270 = vmatprep.subr.mxu0 0.0
    %271 = vmatpush1.msra.mxu0 0.0
    %272 = vmatprep.mubr.f32.mxu0 0.0
    %273 = vmatmul.mubr.f32.gmra.mrb[0].mxu0 %v43
    %v274 = vpop.f32.mrb[0].mxu0
    %v275 = vadd.f32 %v109, %v274
    %v276 = vpop.f32.mrb[0].mxu0
    %277 = vmatprep.mubr.f32.mxu0 0.0
    %278 = vmatmul.mubr.f32.gmra.mrb[0].mxu0 %v44
    %v279 = vpop.f32.mrb[0].mxu0
    %v280 = vadd.f32 %v109, %v279
    %v281 = vpop.f32.mrb[0].mxu0
    %282 = vmatprep.mubr.f32.mxu0 0.0
    %283 = vmatmul.mubr.f32.gmra.mrb[0].mxu0 %v45
    %v284 = vpop.f32.mrb[0].mxu0
    %v285 = vadd.f32 %v109, %v284
    %v286 = vpop.f32.mrb[0].mxu0
    %287 = vmatprep.mubr.f32.mxu0 0.0
    %288 = vmatmul.mubr.f32.gmra.mrb[0].mxu0 %v46
    %v289 = vpop.f32.mrb[0].mxu0
    %v290 = vadd.f32 %v109, %v289
    %v291 = vpop.f32.mrb[0].mxu0
    %292 = vmatprep.mubr.f32.mxu0 0.0
    %293 = vmatmul.mubr.f32.gmra.mrb[0].mxu0 %v47
    %v294 = vpop.f32.mrb[0].mxu0
    %v295 = vadd.f32 %v109, %v294
    %v296 = vpop.f32.mrb[0].mxu0
    %297 = vdwg.mxu0
    %298 = vst [vmem:[#allocation7] sm:$0xff] %v180
    %299 = vst [vmem:[#allocation7 + $0x8] sm:$0xff] %v182
    %300 = vst [vmem:[#allocation7 + $0x10] sm:$0xff] %v275
    %301 = vst [vmem:[#allocation7 + $0x18] sm:$0xff] %v186
    %302 = vst [vmem:[#allocation7 + $0x20] sm:$0xff] %v188
    %303 = vst [vmem:[#allocation7 + $0x28] sm:$0xff] %v280
    %304 = vst [vmem:[#allocation7 + $0x30] sm:$0xff] %v192
    %305 = vst [vmem:[#allocation7 + $0x38] sm:$0xff] %v194
    %306 = vst [vmem:[#allocation7 + $0x40] sm:$0xff] %v285
    %307 = vst [vmem:[#allocation7 + $0x48] sm:$0xff] %v198
    %308 = vst [vmem:[#allocation7 + $0x50] sm:$0xff] %v200
    %309 = vst [vmem:[#allocation7 + $0x58] sm:$0xff] %v290
    %310 = vst [vmem:[#allocation7 + $0x60] sm:$0xff] %v204
    %311 = vst [vmem:[#allocation7 + $0x68] sm:$0xff] %v206
    %312 = vst [vmem:[#allocation7 + $0x70] sm:$0xff] %v295
    // Predicated region
    $region22: #{tpu_custom_call.1} parent=1 // pred_check
      _
    $region23: #{tpu_custom_call.1} parent=1 // pred_check_branch
      %314 = sbr.rel (0) target = $region25
    $region24: #{tpu_custom_call.1} parent=1 // pred_region
      %s316 = ssub.s32 1920, 1920
      %317 = vsyncadd [#allocation4], %s316
      %s318 = sshll.u32 [#allocation7], 4
      %s319 = int_to_ptr.vmem [resolvable:$true] %s318
      %324 = dma.vmem_to_hbm [thread:$0]  %s319, 1920, %s3, [#allocation4], 384, 384, 24
    $region25: #{tpu_custom_call.1} parent=1 // pred_fallthru
      _
    // Predicated region
    $region26: #{tpu_custom_call.1} parent=1 // pred_check
      _
    $region27: #{tpu_custom_call.1} parent=1 // pred_check_branch
      %326 = sbr.rel (0) target = $region29
    $region28: #{tpu_custom_call.1} parent=1 // pred_region
      %327 = dma.done [#allocation4], 1920
    $region29: #{tpu_custom_call.1} parent=1 // pred_fallthru
      _
    %328 = vsyncpa [#allocation3], 1
    %329 = vsyncpa [#allocation6], 1
    %330 = vsyncpa [#allocation4], 1

</llo_original>
